<compile_context>
chip_gen: v5e
topology: v5e:2x2
jax: 0.10.0
libtpu: 0.0.40
codegen_flags: <defaults>
</compile_context>

<pallas_src>
import functools

import jax
import jax.numpy as jnp
from jax.experimental import pallas as pl
from jax.experimental.pallas import tpu as pltpu


def _round_up(x, m):
    return (x + m - 1) // m * m


def _topk_acc_kernel(x_ref, t_ref, out_ref, acc_ref, *, topk, nbbx, tile_n,
                     g_inner):
    """Streamed top-k accuracy.

    x_ref  : VMEM (tile_n, C) logits (native dtype, cast here)
    t_ref  : VMEM (tile_n, 1) int32 target class per box
    out_ref: VMEM (1, 1, 128) float32 per-outer-chunk scaled counts
             (lane j holds the partial result for topk[j])
    acc_ref: VMEM (1, 128) float32 running counts (resident across inner axis)
    """
    o = pl.program_id(0)  # "parallel" outer chunk of boxes
    i = pl.program_id(1)  # "arbitrary" inner (accumulation) axis

    @pl.when(i == 0)
    def _():
        acc_ref[...] = jnp.zeros_like(acc_ref)

    x = x_ref[...].astype(jnp.float32)            # (tile_n, C)
    tgt = t_ref[...]                              # (tile_n, 1) int32
    n_rows, c = x.shape

    # One-hot gather of the target-class score (no dynamic lane gather on TPU).
    class_ids = jax.lax.broadcasted_iota(jnp.int32, (n_rows, c), 1)
    tgt_score = jnp.sum(jnp.where(class_ids == tgt, x, 0.0),
                        axis=-1, keepdims=True)                    # (tile_n, 1)

    # Rank of the target = #classes with strictly greater score; target is in
    # the top-k predictions iff rank < k.
    # TODO(synk): torch.topk's index-order tie-breaking on exactly-equal
    # logits is not reproduced (irrelevant for continuous-valued logits).
    greater = jnp.sum((x > tgt_score).astype(jnp.float32),
                      axis=-1, keepdims=True)                      # (tile_n, 1)

    # Threshold vector: lane j holds topk[j] for j < len(topk), else 0
    # (greater >= 0, so unused lanes never contribute).
    lane = jax.lax.broadcasted_iota(jnp.int32, (1, 128), 1)
    thr = jnp.zeros((1, 128), jnp.float32)
    for j, k in enumerate(topk):
        thr = jnp.where(lane == j, jnp.float32(k), thr)

    # Mask padded rows (N is rounded up to the grid size in the wrapper).
    row0 = (o * g_inner + i) * tile_n
    rows = row0 + jax.lax.broadcasted_iota(jnp.int32, (n_rows, 1), 0)
    valid = rows < nbbx                                            # (tile_n, 1)

    # contrib[r, j] = 1.0 iff box r's label is within top-topk[j] and r valid.
    contrib = ((greater < thr) & valid).astype(jnp.float32)        # (tile_n,128)
    acc_ref[...] += jnp.sum(contrib, axis=0, keepdims=True)        # (1, 128)

    @pl.when(i == g_inner - 1)
    def _():
        out_ref[...] = (acc_ref[...] * (100.0 / nbbx))[None]       # (1, 1, 128)


def detection_class_accuracy(outputs, targets, topk=(1, 5)):
    """Pallas wrapper. outputs: (N, C) float (any dtype), targets: (N,) int."""
    n, c = outputs.shape
    topk = tuple(int(k) for k in topk)
    assert len(topk) <= 128, "at most 128 distinct k values supported"

    # Tile the box axis. 512 rows keeps 2 double-buffered input tiles well
    # inside the v7x scoped-VMEM budget for any realistic class count while
    # amortizing the ~0.35us per-grid-step overhead.
    tile_n = min(512, _round_up(n, 8))
    n_tiles = pl.cdiv(n, tile_n)
    g_outer = 2 if n_tiles >= 2 else 1    # split N across both TCs on v7x
    g_inner = pl.cdiv(n_tiles, g_outer)
    n_pad = g_outer * g_inner * tile_n

    if n_pad != n:
        outputs = jnp.pad(outputs, ((0, n_pad - n), (0, 0)))
        targets = jnp.pad(targets, (0, n_pad - n))
    t2d = targets.reshape(n_pad, 1).astype(jnp.int32)

    # NOTE: logits are passed in their native dtype (no wrapper f32 up-cast);
    # the per-tile cast happens inside the kernel.
    kernel = functools.partial(_topk_acc_kernel, topk=topk, nbbx=n,
                               tile_n=tile_n, g_inner=g_inner)
    partial_counts = pl.pallas_call(
        kernel,
        out_shape=jax.ShapeDtypeStruct((g_outer, 1, 128), jnp.float32),
        grid_spec=pltpu.PrefetchScalarGridSpec(
            num_scalar_prefetch=0,
            grid=(g_outer, g_inner),
            in_specs=[
                pl.BlockSpec((tile_n, c), lambda o, i: (o * g_inner + i, 0)),
                pl.BlockSpec((tile_n, 1), lambda o, i: (o * g_inner + i, 0)),
            ],
            out_specs=pl.BlockSpec((1, 1, 128), lambda o, i: (o, 0, 0)),
            scratch_shapes=[pltpu.VMEM((1, 128), jnp.float32)],
        ),
        compiler_params=pltpu.CompilerParams(
            dimension_semantics=("parallel", "arbitrary")),
    )(outputs, t2d)

    # Combine the (at most 2) per-outer-chunk partials; scale already applied.
    acc = jnp.sum(partial_counts, axis=0)[0]          # (128,)
    # TODO(synk): when C << 128, pack several boxes per lane row (segmented
    # lane reduction) to recover the unused-lane HBM bandwidth.

    # PyTorch module returns a list of 1-element tensors, one per k.
    return [acc[j:j + 1] for j in range(len(topk))]


def _reference(outputs, targets, topk):
    """Pure-JAX reference mirroring the PyTorch forward."""
    n = outputs.shape[0]
    maxk = max(topk)
    pred = jnp.argsort(-outputs, axis=1)[:, :maxk]     # like topk indices
    correct = pred == targets[:, None]                 # (N, maxk)
    return [correct[:, :k].astype(jnp.float32).sum() * (100.0 / n)
            for k in topk]


if __name__ == "__main__":
    key = jax.random.PRNGKey(0)
    TOPK = (1, 5)

    # Small case: single tile, single core chunk.
    k_logits, k_labels, key = jax.random.split(key, 3)
    N, C = 16, 32
    outputs = jax.random.normal(k_logits, (N, C), dtype=jnp.float32)
    targets = jax.random.randint(k_labels, (N,), 0, C, dtype=jnp.int32)

    res = detection_class_accuracy(outputs, targets, topk=TOPK)
    res = [jax.block_until_ready(r) for r in res]
    ref = _reference(outputs, targets, TOPK)
    for got, want in zip(res, ref):
        assert jnp.allclose(got[0], want, atol=1e-4), (got, want)

    # Larger case: exercises multi-tile streaming, the 2-chunk parallel axis
    # and the padded-row masking (N not a multiple of the tile size).
    k_logits2, k_labels2, key = jax.random.split(key, 3)
    N2, C2 = 1100, 91
    outputs2 = jax.random.normal(k_logits2, (N2, C2), dtype=jnp.float32)
    targets2 = jax.random.randint(k_labels2, (N2,), 0, C2, dtype=jnp.int32)

    res2 = detection_class_accuracy(outputs2, targets2, topk=TOPK)
    res2 = [jax.block_until_ready(r) for r in res2]
    ref2 = _reference(outputs2, targets2, TOPK)
    for got, want in zip(res2, ref2):
        assert jnp.allclose(got[0], want, atol=1e-3), (got, want)

    print("KERNEL_OK")
</pallas_src>

<mosaic_0001>
module attributes {stable_mosaic.version = 11 : i64} {
  func.func @_topk_acc_kernel(%arg0: i32, %arg1: i32, %arg2: memref<16x32xf32, #tpu.memory_space<vmem>>, %arg3: memref<16x1xi32, #tpu.memory_space<vmem>>, %arg4: memref<1x1x128xf32, #tpu.memory_space<vmem>>, %arg5: memref<1x128xf32, #tpu.memory_space<vmem>>) attributes {dimension_semantics = [#tpu.dimension_semantics<parallel>, #tpu.dimension_semantics<arbitrary>], iteration_bounds = array<i64: 1, 1>, scalar_prefetch = 0 : i64, scratch_operands = 1 : i64, tpu.core_type = #tpu.core_type<tc>, window_params = [{transform_indices = @transform_0, window_bounds = array<i64: 16, 32>}, {transform_indices = @transform_1, window_bounds = array<i64: 16, 1>}, {transform_indices = @transform_2, window_bounds = array<i64: 1, 1, 128>}]} {
    %c0_i32 = arith.constant 0 : i32
    %0 = arith.cmpi eq, %arg1, %c0_i32 : i32
    %1 = arith.extui %0 : i1 to i32
    %c0_i32_0 = arith.constant 0 : i32
    %2 = arith.cmpi ne, %1, %c0_i32_0 : i32
    scf.if %2 {
      %cst_19 = arith.constant 0.000000e+00 : f32
      %51 = vector.broadcast %cst_19 : f32 to vector<1x128xf32>
      %c0_20 = arith.constant 0 : index
      %c0_21 = arith.constant 0 : index
      %52 = vector.load %arg5[%c0_20, %c0_21] : memref<1x128xf32, #tpu.memory_space<vmem>>, vector<1x128xf32>
      tpu.vector_store %arg5[%c0_20, %c0_21], %51 {strides = array<i32>} : memref<1x128xf32, #tpu.memory_space<vmem>>, vector<1x128xf32>,
    } else {
    }
    %c0 = arith.constant 0 : index
    %c0_1 = arith.constant 0 : index
    %3 = vector.load %arg2[%c0, %c0_1] : memref<16x32xf32, #tpu.memory_space<vmem>>, vector<16x32xf32>
    %c0_2 = arith.constant 0 : index
    %c0_3 = arith.constant 0 : index
    %4 = vector.load %arg3[%c0_2, %c0_3] : memref<16x1xi32, #tpu.memory_space<vmem>>, vector<16x1xi32>
    %5 = tpu.iota {dimensions = array<i32: 1>} : vector<16x32xi32>
    %6 = vector.broadcast %4 : vector<16x1xi32> to vector<16x32xi32>
    %7 = arith.cmpi eq, %5, %6 : vector<16x32xi32>
    %cst = arith.constant 0.000000e+00 : f32
    %8 = vector.broadcast %cst : f32 to vector<16x32xf32>
    %9 = arith.select %7, %3, %8 : vector<16x32xi1>, vector<16x32xf32>
    %cst_4 = arith.constant dense<0.000000e+00> : vector<16xf32>
    %10 = vector.multi_reduction <add>, %9, %cst_4 [1] : vector<16x32xf32> to vector<16xf32>
    %11 = vector.shape_cast %10 : vector<16xf32> to vector<16x1xf32>
    %12 = vector.broadcast %11 : vector<16x1xf32> to vector<16x32xf32>
    %13 = arith.cmpf ogt, %3, %12 : vector<16x32xf32>
    %14 = arith.extui %13 : vector<16x32xi1> to vector<16x32xi32>
    %15 = arith.sitofp %14 : vector<16x32xi32> to vector<16x32xf32>
    %cst_5 = arith.constant dense<0.000000e+00> : vector<16xf32>
    %16 = vector.multi_reduction <add>, %15, %cst_5 [1] : vector<16x32xf32> to vector<16xf32>
    %17 = vector.shape_cast %16 : vector<16xf32> to vector<16x1xf32>
    %18 = tpu.iota {dimensions = array<i32: 1>} : vector<1x128xi32>
    %cst_6 = arith.constant 0.000000e+00 : f32
    %19 = vector.broadcast %cst_6 : f32 to vector<1x128xf32>
    %c0_i32_7 = arith.constant 0 : i32
    %20 = vector.broadcast %c0_i32_7 : i32 to vector<1x128xi32>
    %21 = arith.cmpi eq, %18, %20 : vector<1x128xi32>
    %cst_8 = arith.constant 1.000000e+00 : f32
    %22 = vector.broadcast %cst_8 : f32 to vector<1x128xf32>
    %23 = arith.select %21, %22, %19 : vector<1x128xi1>, vector<1x128xf32>
    %c1_i32 = arith.constant 1 : i32
    %24 = vector.broadcast %c1_i32 : i32 to vector<1x128xi32>
    %25 = arith.cmpi eq, %18, %24 : vector<1x128xi32>
    %cst_9 = arith.constant 5.000000e+00 : f32
    %26 = vector.broadcast %cst_9 : f32 to vector<1x128xf32>
    %27 = arith.select %25, %26, %23 : vector<1x128xi1>, vector<1x128xf32>
    %c1_i32_10 = arith.constant 1 : i32
    %28 = arith.muli %arg0, %c1_i32_10 : i32
    %29 = arith.addi %28, %arg1 : i32
    %c16_i32 = arith.constant 16 : i32
    %30 = arith.muli %29, %c16_i32 : i32
    %31 = tpu.iota {dimensions = array<i32: 0>} : vector<16x1xi32>
    %32 = vector.broadcast %30 : i32 to vector<16x1xi32>
    %33 = arith.addi %32, %31 : vector<16x1xi32>
    %c16_i32_11 = arith.constant 16 : i32
    %34 = vector.broadcast %c16_i32_11 : i32 to vector<16x1xi32>
    %35 = arith.cmpi slt, %33, %34 : vector<16x1xi32>
    %36 = vector.broadcast %17 : vector<16x1xf32> to vector<16x128xf32>
    %37 = vector.broadcast %27 : vector<1x128xf32> to vector<16x128xf32>
    %38 = arith.cmpf olt, %36, %37 : vector<16x128xf32>
    %39 = vector.broadcast %35 : vector<16x1xi1> to vector<16x128xi1>
    %40 = arith.andi %38, %39 : vector<16x128xi1>
    %41 = arith.extui %40 : vector<16x128xi1> to vector<16x128xi32>
    %42 = arith.sitofp %41 : vector<16x128xi32> to vector<16x128xf32>
    %c0_12 = arith.constant 0 : index
    %c0_13 = arith.constant 0 : index
    %43 = vector.load %arg5[%c0_12, %c0_13] : memref<1x128xf32, #tpu.memory_space<vmem>>, vector<1x128xf32>
    %cst_14 = arith.constant dense<0.000000e+00> : vector<128xf32>
    %44 = vector.multi_reduction <add>, %42, %cst_14 [0] : vector<16x128xf32> to vector<128xf32>
    %45 = vector.shape_cast %44 : vector<128xf32> to vector<1x128xf32>
    %46 = arith.addf %43, %45 : vector<1x128xf32>
    %c0_15 = arith.constant 0 : index
    %c0_16 = arith.constant 0 : index
    %47 = vector.load %arg5[%c0_15, %c0_16] : memref<1x128xf32, #tpu.memory_space<vmem>>, vector<1x128xf32>
    tpu.vector_store %arg5[%c0_15, %c0_16], %46 {strides = array<i32>} : memref<1x128xf32, #tpu.memory_space<vmem>>, vector<1x128xf32>,
    %c0_i32_17 = arith.constant 0 : i32
    %48 = arith.cmpi eq, %arg1, %c0_i32_17 : i32
    %49 = arith.extui %48 : i1 to i32
    %c0_i32_18 = arith.constant 0 : i32
    %50 = arith.cmpi ne, %49, %c0_i32_18 : i32
    scf.if %50 {
      %c0_19 = arith.constant 0 : index
      %c0_20 = arith.constant 0 : index
      %51 = vector.load %arg5[%c0_19, %c0_20] : memref<1x128xf32, #tpu.memory_space<vmem>>, vector<1x128xf32>
      %cst_21 = arith.constant 6.250000e+00 : f32
      %52 = vector.broadcast %cst_21 : f32 to vector<1x128xf32>
      %53 = arith.mulf %51, %52 : vector<1x128xf32>
      %54 = vector.shape_cast %53 : vector<1x128xf32> to vector<1x1x128xf32>
      %c0_22 = arith.constant 0 : index
      %c0_23 = arith.constant 0 : index
      %c0_24 = arith.constant 0 : index
      %55 = vector.load %arg4[%c0_22, %c0_23, %c0_24] : memref<1x1x128xf32, #tpu.memory_space<vmem>>, vector<1x1x128xf32>
      tpu.vector_store %arg4[%c0_22, %c0_23, %c0_24], %54 {strides = array<i32>} : memref<1x1x128xf32, #tpu.memory_space<vmem>>, vector<1x1x128xf32>,
    } else {
    }
    return
  }
  func.func @transform_0(%arg0: i32, %arg1: i32) -> (i32, i32) {
    %c1_i32 = arith.constant 1 : i32
    %0 = arith.muli %arg0, %c1_i32 : i32
    %1 = arith.addi %0, %arg1 : i32
    %c0_i32 = arith.constant 0 : i32
    %c0_i32_0 = arith.constant 0 : i32
    return %1, %c0_i32 : i32, i32
  }
  func.func @transform_1(%arg0: i32, %arg1: i32) -> (i32, i32) {
    %c1_i32 = arith.constant 1 : i32
    %0 = arith.muli %arg0, %c1_i32 : i32
    %1 = arith.addi %0, %arg1 : i32
    %c0_i32 = arith.constant 0 : i32
    %c0_i32_0 = arith.constant 0 : i32
    return %1, %c0_i32 : i32, i32
  }
  func.func @transform_2(%arg0: i32, %arg1: i32) -> (i32, i32, i32) {
    %c0_i32 = arith.constant 0 : i32
    %c0_i32_0 = arith.constant 0 : i32
    %c0_i32_1 = arith.constant 0 : i32
    return %arg0, %c0_i32, %c0_i32_0 : i32, i32, i32
  }
}

</mosaic_0001>

<llo_original>
// kernel: tpu_custom_call.1
$region0: #{tpu_custom_call.1}
  #allocation0 [shape = 'u32[]', space=smem, size = 0x4, offset = 0x4, fixed_abs, tag = 'smem constant byte address 0x4 - core index']
  #allocation1 [shape = 'u32[72,128]{1,0:T(1,128)}', space=vmem, size = 0x9000, scoped, tag = 'internal scratch']
  #allocation2 [shape = 'f32[1,128]{1,0:T(1,128)}', space=vmem, size = 0x200, scoped, tag = 'scratch operand']
  %s0 = inlined_call_operand.vmem [shape: f32[16,32], index: 0, kind: input, shape index: {}]
  %s1 = inlined_call_operand.vmem [shape: s32[16,1], index: 1, kind: input, shape index: {}]
  %s2 = inlined_call_operand.hbm [shape: f32[1,1,128], index: 2, kind: output, shape index: {}]
  %s3 = sld [smem:[#allocation0]]
  $region26: #{tpu_custom_call.1} parent=0
    _
  %s5 = ssub.s32 1, %s3
  %s6 = scalar_select 0, %s5, %s3
  $region1: #{tpu_custom_call.1} parent=0
    #allocation3 [shape = 'u8[512]{0}', space=vmem, size = 0x400, scoped, tag = 'output window, operand 0, single buffered']
    #allocation4 [shape = 's32[1]{0}', space=sflag, size = 0x4, scoped, tag = 'scoped memory for tpu_custom_call.1']
    %7 = vsyncpa [#allocation4], 0
    // Predicated region
    $region2: #{tpu_custom_call.1} parent=1 // pred_check
      _
    $region3: #{tpu_custom_call.1} parent=1 // pred_check_branch
      %9 = sbr.rel (0) target = $region5
    $region4: #{tpu_custom_call.1} parent=1 // pred_region
      %s10 = sadd.s32 0, 0
      %s11 = smul.u32 2, %s10
      %p12 = scmp.lt.s32.totalorder %s11, 1
      %s13 = scalar_select %p12, %s11, 1
      %s14 = smul.addr %s13, 8
      %s15 = scalar_lea.vmem %s0, %s14
      %s16 = sadd.s32 0, 0
      %s17 = smul.u32 2, %s16
    $region5: #{tpu_custom_call.1} parent=1 // pred_fallthru
      _
    // Predicated region
    $region6: #{tpu_custom_call.1} parent=1 // pred_check
      _
    $region7: #{tpu_custom_call.1} parent=1 // pred_check_branch
      %19 = sbr.rel (0) target = $region9
    $region8: #{tpu_custom_call.1} parent=1 // pred_region
      %s20 = sadd.s32 0, 0
      %s21 = smul.u32 2, %s20
      %p22 = scmp.lt.s32.totalorder %s21, 1
      %s23 = scalar_select %p22, %s21, 1
      %s24 = smul.addr %s23, 8
      %s25 = scalar_lea.vmem %s1, %s24
      %s26 = sadd.s32 0, 0
      %s27 = smul.u32 2, %s26
    $region9: #{tpu_custom_call.1} parent=1 // pred_fallthru
      _
    %s28 = sadd.s32 0, 0
    %s29 = smul.u32 2, %s28
    %p30 = scmp.lt.s32.totalorder %s29, 1
    %s31 = scalar_select %p30, %s29, 1
    %s32 = smul.addr %s31, 8
    %s33 = scalar_lea.vmem %s0, %s32
    %s34 = sadd.s32 0, 0
    %s35 = smul.u32 2, %s34
    %p36 = scmp.lt.s32.totalorder %s35, 1
    %s37 = scalar_select %p36, %s35, 1
    %s38 = smul.addr %s37, 8
    %s39 = scalar_lea.vmem %s1, %s38
    %s40 = sadd.s32 0, 0
    %s41 = smul.u32 2, %s40
    %p42 = scmp.lt.s32.totalorder %s41, 1
    %s43 = scalar_select %p42, %s41, 1
    %s44 = smul.addr %s43, 8
    %s45 = scalar_lea.vmem %s0, %s44
    %s46 = sadd.s32 0, 0
    %s47 = smul.u32 2, %s46
    %s48 = sadd.s32 0, 0
    %s49 = smul.u32 2, %s48
    %p50 = scmp.lt.s32.totalorder %s49, 1
    %s51 = scalar_select %p50, %s49, 1
    %s52 = smul.addr %s51, 8
    %s53 = scalar_lea.vmem %s1, %s52
    %s54 = sadd.s32 0, 0
    %s55 = smul.u32 2, %s54
    %p56 = scmp.eq.s32.totalorder 0, 0
    // Predicated region
    $region10: #{tpu_custom_call.1} parent=1 // pred_check
      %p57 = pneg %p56
    $region11: #{tpu_custom_call.1} parent=1 // pred_check_branch
      %59 = sbr.rel (%p57) target = $region13
    $region12: #{tpu_custom_call.1} parent=1 // pred_region
      %60 = vst [vmem:[#allocation2] sm:$0x1] 0.0
    $region13: #{tpu_custom_call.1} parent=1 // pred_fallthru
      _
    %v61 = vld [vmem:[%s45] sm:$0xff]
    %v62 = vld [vmem:[%s45 + $0x8] sm:$0xff]
    %v63 = vld [vmem:[%s53] sm:$0xff]
    %v64 = vld [vmem:[%s53 + $0x8] sm:$0xff]
    %v65 = vlaneseq
    %v66 = vand.u32 %v65, 127
    %67 = vset.pattern.permute.xlu0 0
    %68 = vperm.xlu0 %67, %v63
    %v69 = vpop.permute.xlu0 %68
    %70 = vset.pattern.permute.xlu0 0
    %71 = vperm.xlu0 %70, %v64
    %v72 = vpop.permute.xlu0 %71
    %vm73 = vcmp.eq.s32.totalorder %v66, %v69
    %vm74 = vcmp.eq.s32.totalorder %v66, %v72
    %v75 = vsel %vm73, %v61, 0.0
    %v76 = vsel %vm74, %v62, 0.0
    %vm77 = vcmask 261120
    %v78 = vsel %vm77, %v75, 0.0
    %79 = vadd.xlane.f32.xlu0 %v78
    %v80 = vpop.xlane.xlu0 %79
    %v81 = vsel %vm77, %v76, 0.0
    %82 = vadd.xlane.f32.xlu0 %v81
    %v83 = vpop.xlane.xlu0 %82
    %vm84 = vcmp.gt.f32.partialorder %v61, %v80
    %vm85 = vcmp.gt.f32.partialorder %v62, %v83
    %v86 = vsel %vm84, 1, 0
    %v87 = vsel %vm85, 1, 0
    %v88 = vcvt.s32.f32 %v86
    %v89 = vcvt.s32.f32 %v87
    %v90 = vsel %vm77, %v88, 0.0
    %91 = vadd.xlane.f32.xlu0 %v90
    %v92 = vpop.xlane.xlu0 %91
    %v93 = vsel %vm77, %v89, 0.0
    %94 = vadd.xlane.f32.xlu0 %v93
    %v95 = vpop.xlane.xlu0 %94
    %vm96 = vcmp.eq.s32.totalorder %v66, 0
    %v97 = vsel %vm96, 1.0, 0.0
    %vm98 = vcmp.eq.s32.totalorder %v66, 1
    %v99 = vsel %vm98, 5.0, %v97
    %s100 = sadd.s32 0, 0
    %s101 = smul.u32 %s100, 16
    %v102 = vlaneseq
    %v103 = vshrl.u32 %v102, 7
    %v104 = vadd.s32 %v103, 8
    %v105 = vstv %s101
    %v106 = vadd.s32 %v105, %v103
    %v107 = vadd.s32 %v105, %v104
    %vm108 = vcmp.lt.s32.totalorder %v106, 16
    %vm109 = vcmp.lt.s32.totalorder %v107, 16
    %vm110 = vcmp.lt.f32.partialorder %v92, %v99
    %vm111 = vcmp.lt.f32.partialorder %v95, %v99
    %v112 = vsel %vm108, 1, 0
    %v113 = vsel %vm109, 1, 0
    %vm114 = vcmp.eq.s32.totalorder %v112, 1
    %vm115 = vcmp.eq.s32.totalorder %v113, 1
    %vm116 = vmand %vm110, %vm114
    %vm117 = vmand %vm111, %vm115
    %v118 = vsel %vm116, 1, 0
    %v119 = vsel %vm117, 1, 0
    %v120 = vcvt.s32.f32 %v118
    %v121 = vcvt.s32.f32 %v119
    %v122 = vld [vmem:[#allocation2] sm:$0x1]
    %v123 = vadd.f32 %v120, %v121
    %v124 = vrot.slane %v123, 4
    %v125 = vadd.f32 %v123, %v124
    %v126 = vrot.slane %v125, 2
    %v127 = vadd.f32 %v125, %v126
    %v128 = vrot.slane %v127, 1
    %v129 = vadd.f32 %v127, %v128
    %v130 = vadd.f32 %v122, %v129
    %131 = vst [vmem:[#allocation2] sm:$0x1] %v130
    // Predicated region
    $region14: #{tpu_custom_call.1} parent=1 // pred_check
      %p132 = pneg %p56
    $region15: #{tpu_custom_call.1} parent=1 // pred_check_branch
      %134 = sbr.rel (%p132) target = $region17
    $region16: #{tpu_custom_call.1} parent=1 // pred_region
      %v135 = vld [vmem:[#allocation2] sm:$0x1]
      %v136 = vmul.f32 %v135, 6.25
      %137 = vst [vmem:[#allocation3] sm:$0x1] %v136
    $region17: #{tpu_custom_call.1} parent=1 // pred_fallthru
      _
    // Predicated region
    $region18: #{tpu_custom_call.1} parent=1 // pred_check
      _
    $region19: #{tpu_custom_call.1} parent=1 // pred_check_branch
      %139 = sbr.rel (0) target = $region21
    $region20: #{tpu_custom_call.1} parent=1 // pred_region
      %141 = vsyncadd [#allocation4], 0
      %s143 = sshll.u32 [#allocation3], 4
      %s144 = int_to_ptr.vmem [resolvable:$true] %s143
      %s145 = sshll.u32 %s2, 4
      %s146 = int_to_ptr.hbm [resolvable:$true] %s145
      %148 = dma.vmem_to_hbm [thread:$0]  %s144, 16, %s146, [#allocation4]
    $region21: #{tpu_custom_call.1} parent=1 // pred_fallthru
      _
    // Predicated region
    $region22: #{tpu_custom_call.1} parent=1 // pred_check
      _
    $region23: #{tpu_custom_call.1} parent=1 // pred_check_branch
      %150 = sbr.rel (0) target = $region25
    $region24: #{tpu_custom_call.1} parent=1 // pred_region
      %152 = dma.done [#allocation4], 16
    $region25: #{tpu_custom_call.1} parent=1 // pred_fallthru
      _
    %153 = vsyncpa [#allocation4], 1

</llo_original>
